<compile_context>
chip_gen: v7x
topology: tpu7x:2x2x1
jax: 0.10.0
libtpu: 0.0.40
codegen_flags: <defaults>
</compile_context>

<pallas_src>
import numpy as np
import jax
import jax.numpy as jnp
from jax.experimental import pallas as pl
from jax.experimental.pallas import tpu as pltpu


def _round_up(x, m):
    return ((x + m - 1) // m) * m


# --------------------------------------------------------------------------
# Tiled linear kernel:  y = x @ w + b   (bf16 MXU matmul, f32 accumulation)
# --------------------------------------------------------------------------
def _linear_kernel(x_ref, w_ref, b_ref, o_ref):
    o_ref[...] = (
        jnp.dot(x_ref[...], w_ref[...], preferred_element_type=jnp.float32)
        + b_ref[...]
    ).astype(o_ref.dtype)


def linear_pallas(x, w, b, *, block_m=256, block_n=512):
    """x: [M, K], w: [K, N], b: [N]  ->  [M, N] float32.

    M is padded to a sublane multiple, N to a multiple of 128 (lane-dense
    stores); padding is sliced off before returning.  K is kept whole per tile
    (fine up to BERT-sized K; add a K grid axis + accumulator for huge K).
    """
    M, K = x.shape
    N = w.shape[1]
    tm = min(block_m, _round_up(M, 8))
    tn = min(block_n, _round_up(N, 128))
    M_pad = _round_up(M, tm)
    N_pad = _round_up(N, tn)

    x_p = jnp.pad(x.astype(jnp.bfloat16), ((0, M_pad - M), (0, 0)))
    w_p = jnp.pad(w.astype(jnp.bfloat16), ((0, 0), (0, N_pad - N)))
    b_p = jnp.pad(b.astype(jnp.float32), ((0, N_pad - N),)).reshape(1, N_pad)

    out = pl.pallas_call(
        _linear_kernel,
        out_shape=jax.ShapeDtypeStruct((M_pad, N_pad), jnp.float32),
        grid=(M_pad // tm, N_pad // tn),
        in_specs=[
            pl.BlockSpec((tm, K), lambda i, j: (i, 0)),
            pl.BlockSpec((K, tn), lambda i, j: (0, j)),
            pl.BlockSpec((1, tn), lambda i, j: (0, j)),
        ],
        out_specs=pl.BlockSpec((tm, tn), lambda i, j: (i, j)),
        compiler_params=pltpu.CompilerParams(
            dimension_semantics=("parallel", "parallel"),
            vmem_limit_bytes=32 * 1024 * 1024,
        ),
    )(x_p, w_p, b_p)
    return out[:M, :N]


# --------------------------------------------------------------------------
# Fused bidirectional masked-GRU scan: one kernel invocation for the whole
# sequence and both directions.
# --------------------------------------------------------------------------
def _bigru_scan_kernel(xp_ref, m_ref, whh_ref, bhh_ref, out_ref):
    """xp_ref : (S, 2, B, 3H) f32  precomputed x_t @ W_ih^T + b_ih for both
                                   directions (dir 1 already time-reversed
                                   per sequence); gate order r, z, n.
       m_ref  : (S, B, 1)     f32  validity mask (left-aligned, so shared by
                                   both directions).
       whh_ref: (2, H, 3H)    bf16 W_hh^T per direction.
       bhh_ref: (2, 1, 3H)    f32  b_hh per direction.
       out_ref: (S, 2, B, H)  f32  per-step outputs (zero at padded slots).
    """
    S = xp_ref.shape[0]
    B = xp_ref.shape[2]
    H = out_ref.shape[-1]

    def step(t, h_prev):                                       # h_prev: (2, B, H) f32
        hg = jnp.einsum(
            "dbh,dhg->dbg",
            h_prev.astype(jnp.bfloat16), whh_ref[...],
            preferred_element_type=jnp.float32,
        ) + bhh_ref[...]                                       # (2, B, 3H)
        xg = xp_ref[t]                                         # (2, B, 3H)
        # NOTE: at real model sizes pick H % 128 == 0 so these gate slices are
        # lane-aligned (or use a gate-major (..., 3, H) layout).
        r = jax.nn.sigmoid(xg[..., :H] + hg[..., :H])
        z = jax.nn.sigmoid(xg[..., H:2 * H] + hg[..., H:2 * H])
        n = jnp.tanh(xg[..., 2 * H:] + r * hg[..., 2 * H:])
        h_new = (1.0 - z) * n + z * h_prev
        m = m_ref[t]                                           # (B, 1) -> broadcasts
        out_ref[t] = m * h_new                                 # pad_packed: zeros at pad
        return m * h_new + (1.0 - m) * h_prev                  # hidden frozen at pad

    h0 = jnp.zeros((2, B, H), jnp.float32)
    jax.lax.fori_loop(0, S, step, h0, unroll=True)


def bigru_scan_pallas(xp, mask_tb, whh, bhh):
    """xp: [S,2,B,3H], mask_tb: [S,B,1], whh: [2,H,3H], bhh: [2,3H] -> [S,2,B,H]."""
    S, D, B, threeH = xp.shape
    H = threeH // 3
    return pl.pallas_call(
        _bigru_scan_kernel,
        out_shape=jax.ShapeDtypeStruct((S, D, B, H), jnp.float32),
        compiler_params=pltpu.CompilerParams(vmem_limit_bytes=32 * 1024 * 1024),
    )(
        xp.astype(jnp.float32),
        mask_tb.astype(jnp.float32),
        whh.astype(jnp.bfloat16),
        bhh.reshape(D, 1, threeH).astype(jnp.float32),
    )


# --------------------------------------------------------------------------
# Bidirectional multi-layer GRU over padded sequences (packed-seq semantics)
# --------------------------------------------------------------------------
def bigru_forward(x, mask, gru_params):
    """x: [B, S, E], mask: [B, S] (1/0, left-aligned). Returns [B, S, hidden_dim]."""
    B, S, _ = x.shape
    lens = mask.astype(jnp.int32).sum(-1)                       # (B,)
    t_idx = jnp.arange(S)[None, :]
    # Per-sequence time reversal within the valid region (an involution).
    # Because `rev` keeps the valid region left-aligned, the SAME time-major
    # mask is valid for both directions.
    rev = jnp.where(t_idx < lens[:, None], lens[:, None] - 1 - t_idx, t_idx)
    mask_tb = jnp.transpose(mask.astype(jnp.float32))[:, :, None]   # (S, B, 1)

    def per_seq_gather(a, idx):                                 # a: (B,S,F), idx: (B,S)
        return jnp.take_along_axis(a, idx[:, :, None], axis=1)

    layer_in = x
    for (w_ih_f, w_hh_f, b_ih_f, b_hh_f), (w_ih_b, w_hh_b, b_ih_b, b_hh_b) in gru_params:
        K = layer_in.shape[-1]
        threeH = w_ih_f.shape[0]

        # One input-projection matmul for BOTH directions (N = 6H): the
        # reversal only changes which rows feed the scan, not the projection.
        w_cat = jnp.concatenate([w_ih_f.T, w_ih_b.T], axis=1)            # (K, 6H)
        b_cat = jnp.concatenate([b_ih_f, b_ih_b], axis=0)                # (6H,)
        xp_all = linear_pallas(layer_in.reshape(B * S, K), w_cat, b_cat)  # (B*S, 6H)
        xp_all = xp_all.reshape(B, S, 2, threeH)
        xp_f = xp_all[:, :, 0]                                           # (B, S, 3H)
        xp_b = per_seq_gather(xp_all[:, :, 1], rev)                      # time-reversed
        xp = jnp.transpose(jnp.stack([xp_f, xp_b], axis=0), (2, 0, 1, 3))  # (S,2,B,3H)

        whh = jnp.stack([w_hh_f.T, w_hh_b.T], axis=0)                    # (2, H, 3H)
        bhh = jnp.stack([b_hh_f, b_hh_b], axis=0)                        # (2, 3H)

        scan_out = bigru_scan_pallas(xp, mask_tb, whh, bhh)              # (S, 2, B, H)
        out_f = jnp.transpose(scan_out[:, 0], (1, 0, 2))                 # (B, S, H)
        out_b = per_seq_gather(jnp.transpose(scan_out[:, 1], (1, 0, 2)), rev)
        layer_in = jnp.concatenate([out_f, out_b], axis=-1)              # (B, S, 2H)
    return layer_in


# --------------------------------------------------------------------------
# OpinionDetector forward
# --------------------------------------------------------------------------
def opinion_detector_forward(nn_input, mask_np, word_head_np, params):
    """nn_input: [B,S] int32 (device); mask_np / word_head_np: host numpy [B,S]."""
    B, S = nn_input.shape
    mask = jnp.asarray(mask_np)

    # --- BERT stub: deterministic embedding lookup -> last_hidden_state ---
    bert_feats = params["embed_table"][nn_input]                # (B, S, E)
    # dropout(p=0.5) is identity in eval mode.

    # --- packed bidirectional GRU ---
    rnn_out = bigru_forward(bert_feats, mask, params["gru"])    # (B, S, hidden_dim)

    # --- word_head compaction: indices from HOST inputs, gather on DEVICE ---
    # max_len / gather indices depend only on the host word_head & mask inputs
    # (exactly the data PyTorch's data-dependent shapes come from), so no
    # device sync of computed activations is needed; rnn_out stays on device.
    mask_h = np.asarray(mask_np)
    wh_h = np.asarray(word_head_np)
    s_valid = int(mask_h.sum(-1).max())                         # pad_packed length
    sel = wh_h[:, :s_valid] > 0                                 # (B, s_valid)
    counts = sel.sum(-1)
    max_len = max(int(counts.max()), 1)                         # guard empty selections
    gather_idx = np.zeros((B, max_len), np.int32)
    for i in range(B):
        pos = np.nonzero(sel[i])[0]
        gather_idx[i, : pos.shape[0]] = pos
    reduced_mask_np = (np.arange(max_len)[None, :] < counts[:, None]).astype(np.uint8)

    reduced = jnp.take_along_axis(
        rnn_out, jnp.asarray(gather_idx)[:, :, None], axis=1)   # (B, max_len, Hd)
    reduced = reduced * jnp.asarray(reduced_mask_np, jnp.float32)[:, :, None]

    # --- hidden2tag linear (tiled Pallas matmul; N padded to 128 inside) ---
    Hd = reduced.shape[-1]
    logits = linear_pallas(reduced.reshape(B * max_len, Hd),
                           params["h2t_w"].T, params["h2t_b"])
    logits = logits.reshape(B, max_len, -1)
    return logits, jnp.asarray(reduced_mask_np)


# --------------------------------------------------------------------------
# Deterministic parameter init (shapes per module __init__)
# --------------------------------------------------------------------------
def init_params(key, vocab, embedding_dim, hidden_dim, rnn_layers, tagset_size):
    H = hidden_dim // 2
    keys = jax.random.split(key, 64)
    ki = iter(range(64))

    def u(k, shape, bound):
        return jax.random.uniform(k, shape, jnp.float32, -bound, bound)

    embed_table = u(keys[next(ki)], (vocab, embedding_dim), 0.05)

    gru = []
    bound = 1.0 / np.sqrt(H)
    for layer in range(rnn_layers):
        in_dim = embedding_dim if layer == 0 else hidden_dim
        layer_p = []
        for _ in range(2):  # forward, backward
            w_ih = u(keys[next(ki)], (3 * H, in_dim), bound)
            w_hh = u(keys[next(ki)], (3 * H, H), bound)
            b_ih = u(keys[next(ki)], (3 * H,), bound)
            b_hh = u(keys[next(ki)], (3 * H,), bound)
            layer_p.append((w_ih, w_hh, b_ih, b_hh))
        gru.append(layer_p)

    lb = 1.0 / np.sqrt(hidden_dim)
    h2t_w = u(keys[next(ki)], (tagset_size, hidden_dim), lb)
    h2t_b = u(keys[next(ki)], (tagset_size,), lb)
    return {"embed_table": embed_table, "gru": gru, "h2t_w": h2t_w, "h2t_b": h2t_b}


# --------------------------------------------------------------------------
if __name__ == "__main__":
    B, S = 2, 8
    vocab = 50
    embedding_dim = 32          # stand-in for bert.config.hidden_size
    hidden_dim = 32             # GRU hidden (16 per direction)
    rnn_layers = 2
    tagset_size = 5

    key = jax.random.PRNGKey(0)
    k_tok, k_par = jax.random.split(key)

    nn_input = jax.random.randint(k_tok, (B, S), 0, vocab, dtype=jnp.int32)
    # left-aligned attention mask; lens = [8, 5]
    mask = np.array([[1, 1, 1, 1, 1, 1, 1, 1],
                     [1, 1, 1, 1, 1, 0, 0, 0]], dtype=np.int32)
    word_head = np.array([[1, 0, 1, 1, 0, 1, 0, 1],
                          [1, 1, 0, 1, 1, 0, 0, 0]], dtype=np.int32)

    params = init_params(k_par, vocab, embedding_dim, hidden_dim, rnn_layers, tagset_size)

    logits, reduced_mask = opinion_detector_forward(nn_input, mask, word_head, params)
    jax.block_until_ready(logits)
    jax.block_until_ready(reduced_mask)

    assert logits.shape[0] == B and logits.shape[-1] == tagset_size
    assert reduced_mask.shape == logits.shape[:2]
    print("KERNEL_OK")
</pallas_src>

<mosaic_0001>
module attributes {stable_mosaic.version = 11 : i64} {
  func.func @_linear_kernel(%arg0: i32, %arg1: i32, %arg2: memref<16x32xbf16, #tpu.memory_space<vmem>>, %arg3: memref<32x128xbf16, #tpu.memory_space<vmem>>, %arg4: memref<1x128xf32, #tpu.memory_space<vmem>>, %arg5: memref<16x128xf32, #tpu.memory_space<vmem>>) attributes {dimension_semantics = [#tpu.dimension_semantics<parallel>, #tpu.dimension_semantics<parallel>], iteration_bounds = array<i64: 1, 1>, scalar_prefetch = 0 : i64, scratch_operands = 0 : i64, tpu.core_type = #tpu.core_type<tc>, window_params = [{transform_indices = @transform_0, window_bounds = array<i64: 16, 32>}, {transform_indices = @transform_1, window_bounds = array<i64: 32, 128>}, {transform_indices = @transform_2, window_bounds = array<i64: 1, 128>}, {transform_indices = @transform_3, window_bounds = array<i64: 16, 128>}]} {
    %c0 = arith.constant 0 : index
    %c0_0 = arith.constant 0 : index
    %0 = vector.load %arg2[%c0, %c0_0] : memref<16x32xbf16, #tpu.memory_space<vmem>>, vector<16x32xbf16>
    %c0_1 = arith.constant 0 : index
    %c0_2 = arith.constant 0 : index
    %1 = vector.load %arg3[%c0_1, %c0_2] : memref<32x128xbf16, #tpu.memory_space<vmem>>, vector<32x128xbf16>
    %cst = arith.constant dense<0.000000e+00> : vector<16x128xf32>
    %2 = tpu.matmul %0, %1, %cst {dimension_numbers = #tpu.dot_dimension_numbers<[1], [0], [0], [1], [0, 0, 1, 1], [], []>} : vector<16x32xbf16>, vector<32x128xbf16>, vector<16x128xf32> -> vector<16x128xf32>
    %c0_3 = arith.constant 0 : index
    %c0_4 = arith.constant 0 : index
    %3 = vector.load %arg4[%c0_3, %c0_4] : memref<1x128xf32, #tpu.memory_space<vmem>>, vector<1x128xf32>
    %4 = vector.broadcast %3 : vector<1x128xf32> to vector<16x128xf32>
    %5 = arith.addf %2, %4 : vector<16x128xf32>
    %c0_5 = arith.constant 0 : index
    %c0_6 = arith.constant 0 : index
    %6 = vector.load %arg5[%c0_5, %c0_6] : memref<16x128xf32, #tpu.memory_space<vmem>>, vector<16x128xf32>
    tpu.vector_store %arg5[%c0_5, %c0_6], %5 {strides = array<i32>} : memref<16x128xf32, #tpu.memory_space<vmem>>, vector<16x128xf32>,
    return
  }
  func.func @transform_0(%arg0: i32, %arg1: i32) -> (i32, i32) {
    %c0_i32 = arith.constant 0 : i32
    %c0_i32_0 = arith.constant 0 : i32
    return %arg0, %c0_i32 : i32, i32
  }
  func.func @transform_1(%arg0: i32, %arg1: i32) -> (i32, i32) {
    %c0_i32 = arith.constant 0 : i32
    %c0_i32_0 = arith.constant 0 : i32
    return %c0_i32, %arg1 : i32, i32
  }
  func.func @transform_2(%arg0: i32, %arg1: i32) -> (i32, i32) {
    %c0_i32 = arith.constant 0 : i32
    %c0_i32_0 = arith.constant 0 : i32
    return %c0_i32, %arg1 : i32, i32
  }
  func.func @transform_3(%arg0: i32, %arg1: i32) -> (i32, i32) {
    %c0_i32 = arith.constant 0 : i32
    return %arg0, %arg1 : i32, i32
  }
}

</mosaic_0001>

<llo_original>
// kernel: tpu_custom_call.1
$region0: #{tpu_custom_call.1}
  #allocation0 [shape = 'u32[]', space=smem, size = 0x4, offset = 0x4, fixed_abs, tag = 'smem constant byte address 0x4 - core index']
  #allocation1 [shape = 'u32[144,128]{1,0:T(1,128)}', space=vmem, size = 0x12000, scoped, tag = 'internal scratch']
  %s0 = inlined_call_operand.hbm [shape: bf16[16,32], index: 0, kind: input, shape index: {}]
  %s1 = inlined_call_operand.hbm [shape: bf16[32,128], index: 1, kind: input, shape index: {}]
  %s2 = inlined_call_operand.vmem [shape: f32[1,128], index: 2, kind: input, shape index: {}]
  %s3 = inlined_call_operand.hbm [shape: f32[16,128], index: 3, kind: output, shape index: {}]
  %s4 = sld [smem:[#allocation0]]
  $region30: #{tpu_custom_call.1} parent=0
    _
  %s6 = ssub.s32 1, %s4
  %s7 = scalar_select 0, %s6, %s4
  $region1: #{tpu_custom_call.1} parent=0
    #allocation2 [shape = 'u8[4096]{0}', space=vmem, size = 0x1000, scoped, tag = 'input window, operand 0, single buffered']
    #allocation3 [shape = 's32[1]{0}', space=sflag, size = 0x4, scoped, tag = 'scoped memory for tpu_custom_call.1']
    #allocation4 [shape = 's32[1]{0}', space=sflag, size = 0x4, scoped, tag = 'scoped memory for tpu_custom_call.1']
    #allocation5 [shape = 'u8[8192]{0}', space=vmem, size = 0x2000, scoped, tag = 'input window, operand 1, single buffered']
    #allocation6 [shape = 's32[1]{0}', space=sflag, size = 0x4, scoped, tag = 'scoped memory for tpu_custom_call.1']
    #allocation7 [shape = 'u8[8192]{0}', space=vmem, size = 0x2000, scoped, tag = 'output window, operand 0, single buffered']
    %8 = vsyncpa [#allocation3], 0
    %9 = vsyncpa [#allocation6], 0
    %10 = vsyncpa [#allocation4], 0
    // Predicated region
    $region2: #{tpu_custom_call.1} parent=1 // pred_check
      _
    $region3: #{tpu_custom_call.1} parent=1 // pred_check_branch
      %12 = sbr.rel (0) target = $region5
    $region4: #{tpu_custom_call.1} parent=1 // pred_region
      %s14 = ssub.s32 128, 128
      %15 = vsyncadd [#allocation3], %s14
      %s16 = sshll.u32 [#allocation2], 4
      %s17 = int_to_ptr.vmem [resolvable:$true] %s16
      %22 = dma.hbm_to_vmem [thread:$0]  %s0, 128, %s17, [#allocation3], 64, 64, 4
    $region5: #{tpu_custom_call.1} parent=1 // pred_fallthru
      _
    // Predicated region
    $region6: #{tpu_custom_call.1} parent=1 // pred_check
      _
    $region7: #{tpu_custom_call.1} parent=1 // pred_check_branch
      %24 = sbr.rel (0) target = $region9
    $region8: #{tpu_custom_call.1} parent=1 // pred_region
      %s26 = ssub.s32 256, 256
      %27 = vsyncadd [#allocation6], %s26
      %s28 = sshll.u32 [#allocation5], 4
      %s29 = int_to_ptr.vmem [resolvable:$true] %s28
      %34 = dma.hbm_to_vmem [thread:$0]  %s1, 256, %s29, [#allocation6], 64, 64, 4
    $region9: #{tpu_custom_call.1} parent=1 // pred_fallthru
      _
    // Predicated region
    $region10: #{tpu_custom_call.1} parent=1 // pred_check
      _
    $region11: #{tpu_custom_call.1} parent=1 // pred_check_branch
      %36 = sbr.rel (0) target = $region13
    $region12: #{tpu_custom_call.1} parent=1 // pred_region
      _
    $region13: #{tpu_custom_call.1} parent=1 // pred_fallthru
      _
    // Predicated region
    $region14: #{tpu_custom_call.1} parent=1 // pred_check
      _
    $region15: #{tpu_custom_call.1} parent=1 // pred_check_branch
      %38 = sbr.rel (0) target = $region17
    $region16: #{tpu_custom_call.1} parent=1 // pred_region
      %39 = dma.done [#allocation3], 128
    $region17: #{tpu_custom_call.1} parent=1 // pred_fallthru
      _
    // Predicated region
    $region18: #{tpu_custom_call.1} parent=1 // pred_check
      _
    $region19: #{tpu_custom_call.1} parent=1 // pred_check_branch
      %41 = sbr.rel (0) target = $region21
    $region20: #{tpu_custom_call.1} parent=1 // pred_region
      %42 = dma.done [#allocation6], 256
    $region21: #{tpu_custom_call.1} parent=1 // pred_fallthru
      _
    %v44 = vld [vmem:[#allocation2] sm:$0xf]
    %v45 = vld [vmem:[#allocation2 + $0x4] sm:$0xf]
    %v46 = vld [vmem:[#allocation5] sm:$0xf]
    %v47 = vld [vmem:[#allocation5 + $0x4] sm:$0xf]
    %v48 = vld [vmem:[#allocation5 + $0x8] sm:$0xf]
    %v49 = vld [vmem:[#allocation5 + $0xc] sm:$0xf]
    %v50 = vld [vmem:[%s2] sm:$0x1]
    %v52 = vlaneseq
    %v53 = vshrl.u32 %v52, 7
    %v54 = vsub.s32 0, %v53
    %v55 = vrot.slane %v50, %v54
    %v59 = vunpack.c.l.b16 %v44
    %v60 = vunpack.c.l.b16 %v45
    %v61 = vpack.c.b16 %v60, %v59
    %v66 = vunpack.c.l.b16 %v46
    %v67 = vunpack.c.l.b16 %v47
    %v68 = vunpack.c.l.b16 %v48
    %v69 = vunpack.c.l.b16 %v49
    %v70 = vpack.c.b16 %v67, %v66
    %v71 = vpack.c.b16 %v69, %v68
    %vm74 = vcmask 261120
    %v76 = vsel %vm74, %v61, 0
    %78 = vmatprep.subr.bf16.mxu0 0
    %79 = vmatpush1.bf16.msra.mxu0 %v70
    %80 = vmatprep.subr.bf16.mxu0 0
    %81 = vmatpush1.bf16.msra.mxu0 %v71
    %82 = vmatprep.subr.bf16.mxu0 0
    %83 = vmatpush1.bf16.msra.mxu0 0
    %84 = vmatprep.subr.bf16.mxu0 0
    %85 = vmatpush1.bf16.msra.mxu0 0
    %86 = vmatprep.subr.bf16.mxu0 0
    %87 = vmatpush1.bf16.msra.mxu0 0
    %88 = vmatprep.subr.bf16.mxu0 0
    %89 = vmatpush1.bf16.msra.mxu0 0
    %90 = vmatprep.subr.bf16.mxu0 0
    %91 = vmatpush1.bf16.msra.mxu0 0
    %92 = vmatprep.subr.bf16.mxu0 0
    %93 = vmatpush1.bf16.msra.mxu0 0
    %94 = vmatprep.subr.bf16.mxu0 0
    %95 = vmatpush1.bf16.msra.mxu0 0
    %96 = vmatprep.subr.bf16.mxu0 0
    %97 = vmatpush1.bf16.msra.mxu0 0
    %98 = vmatprep.subr.bf16.mxu0 0
    %99 = vmatpush1.bf16.msra.mxu0 0
    %100 = vmatprep.subr.bf16.mxu0 0
    %101 = vmatpush1.bf16.msra.mxu0 0
    %102 = vmatprep.subr.bf16.mxu0 0
    %103 = vmatpush1.bf16.msra.mxu0 0
    %104 = vmatprep.subr.bf16.mxu0 0
    %105 = vmatpush1.bf16.msra.mxu0 0
    %106 = vmatprep.subr.bf16.mxu0 0
    %107 = vmatpush1.bf16.msra.mxu0 0
    %108 = vmatprep.subr.bf16.mxu0 0
    %109 = vmatpush1.bf16.msra.mxu0 0
    %110 = vmatprep.mubr.bf16.mxu0 0
    %111 = vmatmul.mubr.bf16.gmra.mrb[0].mxu0 %v76
    %v112 = vpop.f32.mrb[0].mxu0
    %v113 = vadd.f32 %v55, %v112
    %v114 = vpop.f32.mrb[0].mxu0
    %v115 = vpop.f32.mrb[0].mxu0
    %v116 = vadd.f32 %v55, %v115
    %v117 = vpop.f32.mrb[0].mxu0
    %118 = vdwg.mxu0
    %119 = vst [vmem:[#allocation7] sm:$0xff] %v113
    %120 = vst [vmem:[#allocation7 + $0x8] sm:$0xff] %v116
    // Predicated region
    $region22: #{tpu_custom_call.1} parent=1 // pred_check
      _
    $region23: #{tpu_custom_call.1} parent=1 // pred_check_branch
      %122 = sbr.rel (0) target = $region25
    $region24: #{tpu_custom_call.1} parent=1 // pred_region
      %s124 = ssub.s32 256, 256
      %125 = vsyncadd [#allocation4], %s124
      %s126 = sshll.u32 [#allocation7], 4
      %s127 = int_to_ptr.vmem [resolvable:$true] %s126
      %132 = dma.vmem_to_hbm [thread:$0]  %s127, 256, %s3, [#allocation4], 128, 128, 8
    $region25: #{tpu_custom_call.1} parent=1 // pred_fallthru
      _
    // Predicated region
    $region26: #{tpu_custom_call.1} parent=1 // pred_check
      _
    $region27: #{tpu_custom_call.1} parent=1 // pred_check_branch
      %134 = sbr.rel (0) target = $region29
    $region28: #{tpu_custom_call.1} parent=1 // pred_region
      %135 = dma.done [#allocation4], 256
    $region29: #{tpu_custom_call.1} parent=1 // pred_fallthru
      _
    %136 = vsyncpa [#allocation3], 1
    %137 = vsyncpa [#allocation6], 1
    %138 = vsyncpa [#allocation4], 1

</llo_original>
